<compile_context>
chip_gen: v7x
topology: tpu7x:2x2x1
jax: 0.10.0
libtpu: 0.0.40
codegen_flags: <defaults>
</compile_context>

<pallas_src>
import functools
import math

import jax
import jax.numpy as jnp
from jax import lax
from jax.experimental import pallas as pl
from jax.experimental.pallas import tpu as pltpu


# ----------------------------- in-kernel helpers -----------------------------

def _layernorm(x, scale, shift, eps=1e-5):
    # matches the book's LayerNorm: unbiased=False variance, eps=1e-5
    mean = jnp.mean(x, axis=-1, keepdims=True)
    var = jnp.mean((x - mean) ** 2, axis=-1, keepdims=True)
    return (x - mean) * lax.rsqrt(var + eps) * scale + shift


def _gelu(x):
    # tanh-approx GELU (same as the custom GELU used by TransformerBlock's FF)
    return 0.5 * x * (1.0 + jnp.tanh(
        jnp.sqrt(2.0 / jnp.pi) * (x + 0.044715 * x ** 3)))


def _bf16(x):
    return x.astype(jnp.bfloat16)


# --------------------------- kernel 1: LN1 + fused QKV ------------------------

def _ln_qkv_kernel(x_ref, ns_ref, nb_ref, wqkv_ref, o_ref):
    x = x_ref[0].astype(jnp.float32)                      # (S, E)
    h = _layernorm(x, ns_ref[...], nb_ref[...])
    o_ref[0] = jnp.dot(_bf16(h), wqkv_ref[...],
                       preferred_element_type=jnp.float32).astype(o_ref.dtype)


def ln_qkv(x, ns, nb, wqkv):
    B, S, E = x.shape
    E3 = wqkv.shape[1]
    return pl.pallas_call(
        _ln_qkv_kernel,
        out_shape=jax.ShapeDtypeStruct((B, S, E3), jnp.float32),
        grid=(B,),
        in_specs=[
            pl.BlockSpec((1, S, E), lambda b: (b, 0, 0)),
            pl.BlockSpec((1, E), lambda b: (0, 0)),
            pl.BlockSpec((1, E), lambda b: (0, 0)),
            pl.BlockSpec((E, E3), lambda b: (0, 0)),
        ],
        out_specs=pl.BlockSpec((1, S, E3), lambda b: (b, 0, 0)),
        compiler_params=pltpu.CompilerParams(dimension_semantics=("parallel",)),
    )(x, ns, nb, wqkv)


# ------------------------ kernel 2: per-(batch, head) attention ---------------

def _attn_kernel(mask_ref, q_ref, kt_ref, v_ref, o_ref, *, scale):
    q = q_ref[0, 0]                                       # (S, hd)  bf16
    kt = kt_ref[0, 0]                                     # (hd, S)  bf16
    v = v_ref[0, 0]                                       # (S, hd)  bf16
    s = jnp.dot(q, kt, preferred_element_type=jnp.float32) * scale
    s = s + mask_ref[...]                                 # additive causal mask (f32)
    m = jnp.max(s, axis=-1, keepdims=True)
    p = jnp.exp(s - m)
    denom = jnp.sum(p, axis=-1, keepdims=True)
    p = p * pl.reciprocal(denom, approx=True)             # EUP, frees VALU
    ctx = jnp.dot(_bf16(p), v, preferred_element_type=jnp.float32)
    o_ref[0, 0] = ctx.astype(o_ref.dtype)


def attention(q, kt, v, mask):
    B, NH, S, HD = q.shape
    scale = 1.0 / math.sqrt(HD)
    return pl.pallas_call(
        functools.partial(_attn_kernel, scale=scale),
        out_shape=jax.ShapeDtypeStruct((B, NH, S, HD), jnp.float32),
        grid=(B, NH),
        in_specs=[
            pl.BlockSpec((S, S), lambda b, h: (0, 0)),          # causal mask
            pl.BlockSpec((1, 1, S, HD), lambda b, h: (b, h, 0, 0)),
            pl.BlockSpec((1, 1, HD, S), lambda b, h: (b, h, 0, 0)),
            pl.BlockSpec((1, 1, S, HD), lambda b, h: (b, h, 0, 0)),
        ],
        out_specs=pl.BlockSpec((1, 1, S, HD), lambda b, h: (b, h, 0, 0)),
        compiler_params=pltpu.CompilerParams(
            dimension_semantics=("parallel", "parallel")),
    )(mask, q, kt, v)


# --------------- kernel 3: out-proj + residual + LN2 + FF + residual ----------

def _proj_ff_kernel(x_ref, ctx_ref, wo_ref, bo_ref, n2s_ref, n2b_ref,
                    w1_ref, b1_ref, w2_ref, b2_ref, o_ref):
    x = x_ref[0].astype(jnp.float32)                      # (S, E) residual stream
    ctx = _bf16(ctx_ref[0])                               # (S, E)

    att = jnp.dot(ctx, wo_ref[...],
                  preferred_element_type=jnp.float32) + bo_ref[...]
    x = x + att                                           # residual (dropout = id)

    h = _layernorm(x, n2s_ref[...], n2b_ref[...])
    h = jnp.dot(_bf16(h), w1_ref[...],
                preferred_element_type=jnp.float32) + b1_ref[...]
    h = _gelu(h)
    h = jnp.dot(_bf16(h), w2_ref[...],
                preferred_element_type=jnp.float32) + b2_ref[...]
    o_ref[0] = (x + h).astype(o_ref.dtype)                # residual (dropout = id)


def proj_ff(x, ctx, p):
    B, S, E = x.shape
    H = p["w1"].shape[1]

    def const(shape):
        return pl.BlockSpec(shape, lambda b: (0, 0))

    return pl.pallas_call(
        _proj_ff_kernel,
        out_shape=jax.ShapeDtypeStruct((B, S, E), jnp.float32),
        grid=(B,),
        in_specs=[
            pl.BlockSpec((1, S, E), lambda b: (b, 0, 0)),   # x (residual)
            pl.BlockSpec((1, S, E), lambda b: (b, 0, 0)),   # ctx
            const((E, E)), const((1, E)),                   # Wo, bo
            const((1, E)), const((1, E)),                   # norm2 scale/shift
            const((E, H)), const((1, H)),                   # FF W1, b1
            const((H, E)), const((1, E)),                   # FF W2, b2
        ],
        out_specs=pl.BlockSpec((1, S, E), lambda b: (b, 0, 0)),
        compiler_params=pltpu.CompilerParams(dimension_semantics=("parallel",)),
    )(x, ctx, p["wo"], p["bo"], p["n2s"], p["n2b"],
      p["w1"], p["b1"], p["w2"], p["b2"])


# --------------------------- final norm + vocab-tiled LM head -----------------

def _head_kernel(x_ref, ns_ref, nb_ref, w_ref, o_ref):
    x = x_ref[0].astype(jnp.float32)                      # (S, E)
    h = _layernorm(x, ns_ref[...], nb_ref[...])
    o_ref[0] = jnp.dot(_bf16(h), w_ref[...],
                       preferred_element_type=jnp.float32).astype(o_ref.dtype)


def final_norm_and_head(x, scale, shift, w_out, tile_v=2048):
    B, S, E = x.shape
    V = w_out.shape[1]
    tv = min(tile_v, V)
    assert V % tv == 0 and (tv == V or tv % 128 == 0)
    return pl.pallas_call(
        _head_kernel,
        out_shape=jax.ShapeDtypeStruct((B, S, V), jnp.float32),
        grid=(B, V // tv),
        in_specs=[
            pl.BlockSpec((1, S, E), lambda b, j: (b, 0, 0)),
            pl.BlockSpec((1, E), lambda b, j: (0, 0)),
            pl.BlockSpec((1, E), lambda b, j: (0, 0)),
            pl.BlockSpec((E, tv), lambda b, j: (0, j)),     # weight streams over V
        ],
        out_specs=pl.BlockSpec((1, S, tv), lambda b, j: (b, 0, j)),
        compiler_params=pltpu.CompilerParams(
            dimension_semantics=("parallel", "parallel")),
    )(x, scale, shift, w_out)


# --------------------------------- GPT model ----------------------------------

def init_gpt_params(key, cfg):
    V, L, E = cfg["vocab_size"], cfg["context_length"], cfg["emb_dim"]
    H = 4 * E
    ks = jax.random.split(key, 3 + 4 * cfg["n_layers"])
    ki = iter(ks)

    def nrm(shape, k, dtype=jnp.float32):
        return (0.02 * jax.random.normal(k, shape)).astype(dtype)

    params = {
        "tok_emb": nrm((V, E), next(ki)),
        "pos_emb": nrm((L, E), next(ki)),
        "out_head": nrm((E, V), next(ki), jnp.bfloat16),      # bias=False
        "final_norm_scale": jnp.ones((1, E), jnp.float32),
        "final_norm_shift": jnp.zeros((1, E), jnp.float32),
        "blocks": [],
    }
    for _ in range(cfg["n_layers"]):
        blk = {
            "wqkv": nrm((E, 3 * E), next(ki), jnp.bfloat16),  # fused, qkv_bias=False
            "wo": nrm((E, E), next(ki), jnp.bfloat16),
            "bo": jnp.zeros((1, E), jnp.float32),
            "n1s": jnp.ones((1, E), jnp.float32),
            "n1b": jnp.zeros((1, E), jnp.float32),
            "n2s": jnp.ones((1, E), jnp.float32),
            "n2b": jnp.zeros((1, E), jnp.float32),
            "w1": nrm((E, H), next(ki), jnp.bfloat16),
            "b1": jnp.zeros((1, H), jnp.float32),
            "w2": nrm((H, E), next(ki), jnp.bfloat16),
            "b2": jnp.zeros((1, E), jnp.float32),
        }
        params["blocks"].append(blk)
    return params


def gpt_forward(params, in_idx, cfg):
    B, S = in_idx.shape
    E = cfg["emb_dim"]
    nh = cfg["n_heads"]
    hd = E // nh

    # Embedding gathers are glue (plain JAX); hot-path matmuls/norms are Pallas.
    tok = jnp.take(params["tok_emb"], in_idx, axis=0)          # (B, S, E)
    pos = params["pos_emb"][:S]                                # (S, E)
    x = (tok + pos[None, :, :]).astype(jnp.float32)
    # TODO(synk): dropout (drop_emb / drop_shortcut) is identity at inference.

    # Additive causal mask, built once and reused by every block (hoisted).
    mask = jnp.where(jnp.arange(S)[None, :] <= jnp.arange(S)[:, None],
                     0.0, -1e30).astype(jnp.float32)           # (S, S)

    for blk in params["blocks"]:
        qkv = ln_qkv(x, blk["n1s"], blk["n1b"], blk["wqkv"])   # (B, S, 3E) f32
        q, k, v = jnp.split(qkv, 3, axis=-1)
        # Head split / K transpose are XLA layout glue (kept out of kernels).
        q = _bf16(q.reshape(B, S, nh, hd).transpose(0, 2, 1, 3))   # (B, nh, S, hd)
        kt = _bf16(k.reshape(B, S, nh, hd).transpose(0, 2, 3, 1))  # (B, nh, hd, S)
        v = _bf16(v.reshape(B, S, nh, hd).transpose(0, 2, 1, 3))   # (B, nh, S, hd)
        ctx = attention(q, kt, v, mask)                            # (B, nh, S, hd) f32
        ctx = ctx.transpose(0, 2, 1, 3).reshape(B, S, E)           # merge heads
        x = proj_ff(x, ctx, blk)

    return final_norm_and_head(x, params["final_norm_scale"],
                               params["final_norm_shift"], params["out_head"])


# ------------------------------ pure-JAX reference ----------------------------

def _mm(a, b):
    # same numerics as the kernels: bf16 operands, f32 accumulation
    return jnp.dot(_bf16(a), _bf16(b), preferred_element_type=jnp.float32)


def gpt_reference(params, in_idx, cfg):
    B, S = in_idx.shape
    E = cfg["emb_dim"]
    nh = cfg["n_heads"]
    hd = E // nh
    scale = 1.0 / math.sqrt(hd)

    x = (jnp.take(params["tok_emb"], in_idx, axis=0)
         + params["pos_emb"][:S][None]).astype(jnp.float32)
    mask = jnp.where(jnp.arange(S)[None, :] <= jnp.arange(S)[:, None],
                     0.0, -1e30).astype(jnp.float32)

    for p in params["blocks"]:
        h = _layernorm(x, p["n1s"], p["n1b"])
        qkv = _mm(h, p["wqkv"])                                # (B, S, 3E)
        q, k, v = jnp.split(qkv, 3, axis=-1)
        q = q.reshape(B, S, nh, hd).transpose(0, 2, 1, 3)
        k = k.reshape(B, S, nh, hd).transpose(0, 2, 1, 3)
        v = v.reshape(B, S, nh, hd).transpose(0, 2, 1, 3)
        s = jnp.einsum("bhqd,bhkd->bhqk", _bf16(q), _bf16(k),
                       preferred_element_type=jnp.float32) * scale
        s = s + mask[None, None]
        m = jnp.max(s, axis=-1, keepdims=True)
        pr = jnp.exp(s - m)
        pr = pr / jnp.sum(pr, axis=-1, keepdims=True)
        ctx = jnp.einsum("bhqk,bhkd->bhqd", _bf16(pr), _bf16(v),
                         preferred_element_type=jnp.float32)
        ctx = ctx.transpose(0, 2, 1, 3).reshape(B, S, E)
        x = x + (_mm(ctx, p["wo"]) + p["bo"])
        h = _layernorm(x, p["n2s"], p["n2b"])
        h = _mm(_gelu(_mm(h, p["w1"]) + p["b1"]), p["w2"]) + p["b2"]
        x = x + h

    x = _layernorm(x, params["final_norm_scale"], params["final_norm_shift"])
    return _mm(x, params["out_head"])


# ----------------------------------- main --------------------------------------

if __name__ == "__main__":
    cfg = {
        "vocab_size": 128,
        "context_length": 16,
        "emb_dim": 32,
        "n_heads": 4,
        "n_layers": 2,
        "drop_rate": 0.0,
        "qkv_bias": False,
    }
    key = jax.random.PRNGKey(0)
    pkey, ikey = jax.random.split(key)
    params = init_gpt_params(pkey, cfg)

    B, S = 2, 8
    in_idx = jax.random.randint(ikey, (B, S), 0, cfg["vocab_size"], dtype=jnp.int32)

    logits = gpt_forward(params, in_idx, cfg)
    logits = jax.block_until_ready(logits)

    ref = gpt_reference(params, in_idx, cfg)
    assert logits.shape == (B, S, cfg["vocab_size"])
    assert bool(jnp.all(jnp.isfinite(logits)))
    max_err = float(jnp.max(jnp.abs(logits - ref)))
    assert bool(jnp.allclose(logits, ref, rtol=2e-2, atol=2e-2)), max_err
    print("KERNEL_OK")
</pallas_src>

<mosaic_0001>
module attributes {stable_mosaic.version = 11 : i64} {
  func.func @_ln_qkv_kernel(%arg0: i32, %arg1: memref<1x8x32xf32, #tpu.memory_space<vmem>>, %arg2: memref<1x32xf32, #tpu.memory_space<vmem>>, %arg3: memref<1x32xf32, #tpu.memory_space<vmem>>, %arg4: memref<32x96xbf16, #tpu.memory_space<vmem>>, %arg5: memref<1x8x96xf32, #tpu.memory_space<vmem>>) attributes {dimension_semantics = [#tpu.dimension_semantics<parallel>], iteration_bounds = array<i64: 2>, scalar_prefetch = 0 : i64, scratch_operands = 0 : i64, tpu.core_type = #tpu.core_type<tc>, window_params = [{transform_indices = @transform_0, window_bounds = array<i64: 1, 8, 32>}, {pipeline_mode = #tpu.pipeline_mode<synchronous>, transform_indices = @transform_1, window_bounds = array<i64: 1, 32>}, {pipeline_mode = #tpu.pipeline_mode<synchronous>, transform_indices = @transform_2, window_bounds = array<i64: 1, 32>}, {pipeline_mode = #tpu.pipeline_mode<synchronous>, transform_indices = @transform_3, window_bounds = array<i64: 32, 96>}, {transform_indices = @transform_4, window_bounds = array<i64: 1, 8, 96>}]} {
    %c0 = arith.constant 0 : index
    %c0_0 = arith.constant 0 : index
    %c0_1 = arith.constant 0 : index
    %0 = vector.load %arg1[%c0, %c0_0, %c0_1] : memref<1x8x32xf32, #tpu.memory_space<vmem>>, vector<1x8x32xf32>
    %1 = vector.shape_cast %0 : vector<1x8x32xf32> to vector<8x32xf32>
    %c0_2 = arith.constant 0 : index
    %c0_3 = arith.constant 0 : index
    %2 = vector.load %arg2[%c0_2, %c0_3] : memref<1x32xf32, #tpu.memory_space<vmem>>, vector<1x32xf32>
    %c0_4 = arith.constant 0 : index
    %c0_5 = arith.constant 0 : index
    %3 = vector.load %arg3[%c0_4, %c0_5] : memref<1x32xf32, #tpu.memory_space<vmem>>, vector<1x32xf32>
    %cst = arith.constant dense<0.000000e+00> : vector<8xf32>
    %4 = vector.multi_reduction <add>, %1, %cst [1] : vector<8x32xf32> to vector<8xf32>
    %5 = vector.shape_cast %4 : vector<8xf32> to vector<8x1xf32>
    %cst_6 = arith.constant 3.200000e+01 : f32
    %6 = vector.broadcast %cst_6 : f32 to vector<8x1xf32>
    %7 = arith.divf %5, %6 : vector<8x1xf32>
    %8 = vector.broadcast %7 : vector<8x1xf32> to vector<8x32xf32>
    %9 = arith.subf %1, %8 : vector<8x32xf32>
    %10 = arith.mulf %9, %9 : vector<8x32xf32>
    %cst_7 = arith.constant dense<0.000000e+00> : vector<8xf32>
    %11 = vector.multi_reduction <add>, %10, %cst_7 [1] : vector<8x32xf32> to vector<8xf32>
    %12 = vector.shape_cast %11 : vector<8xf32> to vector<8x1xf32>
    %cst_8 = arith.constant 3.200000e+01 : f32
    %13 = vector.broadcast %cst_8 : f32 to vector<8x1xf32>
    %14 = arith.divf %12, %13 : vector<8x1xf32>
    %15 = vector.broadcast %7 : vector<8x1xf32> to vector<8x32xf32>
    %16 = arith.subf %1, %15 : vector<8x32xf32>
    %cst_9 = arith.constant 9.99999974E-6 : f32
    %17 = vector.broadcast %cst_9 : f32 to vector<8x1xf32>
    %18 = arith.addf %14, %17 : vector<8x1xf32>
    %19 = math.rsqrt %18 : vector<8x1xf32>
    %20 = vector.broadcast %19 : vector<8x1xf32> to vector<8x32xf32>
    %21 = arith.mulf %16, %20 : vector<8x32xf32>
    %22 = vector.broadcast %2 : vector<1x32xf32> to vector<8x32xf32>
    %23 = arith.mulf %21, %22 : vector<8x32xf32>
    %24 = vector.broadcast %3 : vector<1x32xf32> to vector<8x32xf32>
    %25 = arith.addf %23, %24 : vector<8x32xf32>
    %26 = arith.truncf %25 : vector<8x32xf32> to vector<8x32xbf16>
    %c0_10 = arith.constant 0 : index
    %c0_11 = arith.constant 0 : index
    %27 = vector.load %arg4[%c0_10, %c0_11] : memref<32x96xbf16, #tpu.memory_space<vmem>>, vector<32x96xbf16>
    %cst_12 = arith.constant dense<0.000000e+00> : vector<8x96xf32>
    %28 = tpu.matmul %26, %27, %cst_12 {dimension_numbers = #tpu.dot_dimension_numbers<[1], [0], [0], [1], [0, 0, 1, 1], [], []>} : vector<8x32xbf16>, vector<32x96xbf16>, vector<8x96xf32> -> vector<8x96xf32>
    %c0_13 = arith.constant 0 : index
    %c0_14 = arith.constant 0 : index
    %c0_15 = arith.constant 0 : index
    %29 = vector.load %arg5[%c0_13, %c0_14, %c0_15] : memref<1x8x96xf32, #tpu.memory_space<vmem>>, vector<1x8x96xf32>
    %30 = vector.shape_cast %29 : vector<1x8x96xf32> to vector<8x96xf32>
    %31 = vector.shape_cast %28 : vector<8x96xf32> to vector<1x8x96xf32>
    tpu.vector_store %arg5[%c0_13, %c0_14, %c0_15], %31 {strides = array<i32>} : memref<1x8x96xf32, #tpu.memory_space<vmem>>, vector<1x8x96xf32>,
    return
  }
  func.func @transform_0(%arg0: i32) -> (i32, i32, i32) {
    %c0_i32 = arith.constant 0 : i32
    %c0_i32_0 = arith.constant 0 : i32
    %c0_i32_1 = arith.constant 0 : i32
    return %arg0, %c0_i32, %c0_i32_0 : i32, i32, i32
  }
  func.func @transform_1(%arg0: i32) -> (i32, i32) {
    %c0_i32 = arith.constant 0 : i32
    %c0_i32_0 = arith.constant 0 : i32
    %c0_i32_1 = arith.constant 0 : i32
    return %c0_i32, %c0_i32_0 : i32, i32
  }
  func.func @transform_2(%arg0: i32) -> (i32, i32) {
    %c0_i32 = arith.constant 0 : i32
    %c0_i32_0 = arith.constant 0 : i32
    %c0_i32_1 = arith.constant 0 : i32
    return %c0_i32, %c0_i32_0 : i32, i32
  }
  func.func @transform_3(%arg0: i32) -> (i32, i32) {
    %c0_i32 = arith.constant 0 : i32
    %c0_i32_0 = arith.constant 0 : i32
    %c0_i32_1 = arith.constant 0 : i32
    return %c0_i32, %c0_i32_0 : i32, i32
  }
  func.func @transform_4(%arg0: i32) -> (i32, i32, i32) {
    %c0_i32 = arith.constant 0 : i32
    %c0_i32_0 = arith.constant 0 : i32
    %c0_i32_1 = arith.constant 0 : i32
    return %arg0, %c0_i32, %c0_i32_0 : i32, i32, i32
  }
}

</mosaic_0001>

<llo_original>
// kernel: tpu_custom_call.1
$region0: #{tpu_custom_call.1}
  #allocation0 [shape = 'u32[]', space=smem, size = 0x4, offset = 0x4, fixed_abs, tag = 'smem constant byte address 0x4 - core index']
  #allocation1 [shape = 'u32[144,128]{1,0:T(1,128)}', space=vmem, size = 0x12000, scoped, tag = 'internal scratch']
  %s0 = inlined_call_operand.hbm [shape: f32[2,8,32], index: 0, kind: input, shape index: {}]
  %s1 = inlined_call_operand.vmem [shape: f32[1,32], index: 1, kind: input, shape index: {}]
  %s2 = inlined_call_operand.vmem [shape: f32[1,32], index: 2, kind: input, shape index: {}]
  %s3 = inlined_call_operand.hbm [shape: bf16[32,96], index: 3, kind: input, shape index: {}]
  %s4 = inlined_call_operand.hbm [shape: f32[2,8,96], index: 4, kind: output, shape index: {}]
  %s5 = sld [smem:[#allocation0]]
  $region57: #{tpu_custom_call.1} parent=0
    _
  %s7 = ssub.s32 1, %s5
  %s8 = scalar_select 0, %s7, %s5
  $region1: #{tpu_custom_call.1} parent=0
    #allocation2 [shape = 'u8[8192]{0}', space=vmem, size = 0x2000, scoped, tag = 'input window, operand 0']
    #allocation3 [shape = 's32[2]{0}', space=sflag, size = 0x8, scoped, tag = 'scoped memory for tpu_custom_call.1']
    #allocation4 [shape = 's32[2]{0}', space=sflag, size = 0x8, scoped, tag = 'scoped memory for tpu_custom_call.1']
    #allocation5 [shape = 'u8[8192]{0}', space=vmem, size = 0x2000, scoped, tag = 'input window, operand 3, single buffered']
    #allocation6 [shape = 's32[1]{0}', space=sflag, size = 0x4, scoped, tag = 'scoped memory for tpu_custom_call.1']
    #allocation7 [shape = 'u8[8192]{0}', space=vmem, size = 0x2000, scoped, tag = 'output window, operand 0']
    %9 = vsyncpa [#allocation3], 0
    %s10 = scalar_lea.sflag [#allocation3], 1
    %11 = vsyncpa %s10, 0
    %12 = vsyncpa [#allocation6], 0
    %13 = vsyncpa [#allocation4], 0
    %s14 = scalar_lea.sflag [#allocation4], 1
    %15 = vsyncpa %s14, 0
    loop: start=0, step=1, limit=4
    $region2: #{tpu_custom_call.1} parent=1 // loop_pre_header
      _
    $region3: #{tpu_custom_call.1} parent=1 // loop_header
      %s17 = sphi 0, %s21
      %p18 = scmp.ge.s32.totalorder %s17, 4
      %s27 = sphi 0, %s29
      %s30 = sphi 0, %s27
      %s31 = sphi 0, %s30
      %s47 = sphi 0, %s31
      %s51 = sphi 0, %s51
      %s53 = sphi 0, %s51
      %s54 = sphi 0, %s53
      %s68 = sphi 0, %s54
      %s72 = sphi 0, %s72
      %s74 = sphi 0, %s72
      %s75 = sphi 0, %s74
      %s89 = sphi 0, %s75
      %s93 = sphi 0, %s93
      %s95 = sphi 0, %s93
      %s96 = sphi 0, %s95
      %s110 = sphi 0, %s96
      %s116 = sphi 0, %s118
      %s119 = sphi 0, %s116
      %s120 = sphi 0, %s119
      %s136 = sphi 0, %s120
    $region4: #{tpu_custom_call.1} parent=1 // loop_header_branch
      %20 = sbr.rel (%p18) target = $region8
    $region5: #{tpu_custom_call.1} parent=1 // loop_body
      %s22 = ssub.s32 %s17, 1
      %s23 = ssub.s32 %s17, 2
      %s24 = sadd.s32 %s17, 1
      %s25 = ssub.s32 %s17, %s24
      %p26 = scmp.eq.s32.totalorder %s25, 0
      %s28 = sadd.s32 %s27, 1
      %s29 = scalar_select %p26, %s27, %s28
      %p32 = pneg %p26
      %p33 = scmp.eq.s32.totalorder %s17, 1
      %p34 = por %p32, %p33
      %p35 = scmp.ne.s32.totalorder %s27, %s30
      %p36 = scmp.eq.s32.totalorder %s17, 0
      %p37 = por %p35, %p36
      %p38 = scmp.ne.s32.totalorder %s27, %s30
      %p39 = scmp.eq.s32.totalorder %s22, 1
      %p40 = por %p38, %p39
      %p41 = scmp.ne.s32.totalorder %s30, %s31
      %p42 = scmp.eq.s32.totalorder %s22, 0
      %p43 = por %p41, %p42
      %p44 = scmp.ne.s32.totalorder %s30, %s31
      %p45 = scmp.eq.s32.totalorder %s23, 1
      %p46 = por %p44, %p45
      %p48 = scmp.ne.s32.totalorder %s31, %s47
      %p49 = scmp.eq.s32.totalorder %s23, 0
      %p50 = por %p48, %p49
      %s52 = sadd.s32 %s51, 1
      %p55 = scmp.eq.s32.totalorder %s17, 1
      %p56 = scmp.ne.s32.totalorder %s51, %s53
      %p57 = scmp.eq.s32.totalorder %s17, 0
      %p58 = por %p56, %p57
      %p59 = scmp.ne.s32.totalorder %s51, %s53
      %p60 = scmp.eq.s32.totalorder %s22, 1
      %p61 = por %p59, %p60
      %p62 = scmp.ne.s32.totalorder %s53, %s54
      %p63 = scmp.eq.s32.totalorder %s22, 0
      %p64 = por %p62, %p63
      %p65 = scmp.ne.s32.totalorder %s53, %s54
      %p66 = scmp.eq.s32.totalorder %s23, 1
      %p67 = por %p65, %p66
      %p69 = scmp.ne.s32.totalorder %s54, %s68
      %p70 = scmp.eq.s32.totalorder %s23, 0
      %p71 = por %p69, %p70
      %s73 = sadd.s32 %s72, 1
      %p76 = scmp.eq.s32.totalorder %s17, 1
      %p77 = scmp.ne.s32.totalorder %s72, %s74
      %p78 = scmp.eq.s32.totalorder %s17, 0
      %p79 = por %p77, %p78
      %p80 = scmp.ne.s32.totalorder %s72, %s74
      %p81 = scmp.eq.s32.totalorder %s22, 1
      %p82 = por %p80, %p81
      %p83 = scmp.ne.s32.totalorder %s74, %s75
      %p84 = scmp.eq.s32.totalorder %s22, 0
      %p85 = por %p83, %p84
      %p86 = scmp.ne.s32.totalorder %s74, %s75
      %p87 = scmp.eq.s32.totalorder %s23, 1
      %p88 = por %p86, %p87
      %p90 = scmp.ne.s32.totalorder %s75, %s89
      %p91 = scmp.eq.s32.totalorder %s23, 0
      %p92 = por %p90, %p91
      %s94 = sadd.s32 %s93, 1
      %p97 = scmp.eq.s32.totalorder %s17, 1
      %p98 = scmp.ne.s32.totalorder %s93, %s95
      %p99 = scmp.eq.s32.totalorder %s17, 0
      %p100 = por %p98, %p99
      %p101 = scmp.ne.s32.totalorder %s93, %s95
      %p102 = scmp.eq.s32.totalorder %s22, 1
      %p103 = por %p101, %p102
      %p104 = scmp.ne.s32.totalorder %s95, %s96
      %p105 = scmp.eq.s32.totalorder %s22, 0
      %p106 = por %p104, %p105
      %p107 = scmp.ne.s32.totalorder %s95, %s96
      %p108 = scmp.eq.s32.totalorder %s23, 1
      %p109 = por %p107, %p108
      %p111 = scmp.ne.s32.totalorder %s96, %s110
      %p112 = scmp.eq.s32.totalorder %s23, 0
      %p113 = por %p111, %p112
      %s114 = ssub.s32 %s17, %s24
      %p115 = scmp.eq.s32.totalorder %s114, 0
      %s117 = sadd.s32 %s116, 1
      %s118 = scalar_select %p115, %s116, %s117
      %p121 = pneg %p115
      %p122 = scmp.eq.s32.totalorder %s17, 1
      %p123 = por %p121, %p122
      %p124 = scmp.ne.s32.totalorder %s116, %s119
      %p125 = scmp.eq.s32.totalorder %s17, 0
      %p126 = por %p124, %p125
      %p127 = scmp.ne.s32.totalorder %s116, %s119
      %p128 = scmp.eq.s32.totalorder %s22, 1
      %p129 = por %p127, %p128
      %p130 = scmp.ne.s32.totalorder %s119, %s120
      %p131 = scmp.eq.s32.totalorder %s22, 0
      %p132 = por %p130, %p131
      %p133 = scmp.ne.s32.totalorder %s119, %s120
      %p134 = scmp.eq.s32.totalorder %s23, 1
      %p135 = por %p133, %p134
      %p137 = scmp.ne.s32.totalorder %s120, %s136
      %p138 = scmp.eq.s32.totalorder %s23, 0
      %p139 = por %p137, %p138
      %p140 = scmp.le.s32.totalorder 1, %s17
      %p141 = scmp.lt.s32.totalorder %s17, 3
      %p142 = pnand %p140, %p141
      %p143 = pneg %p142
      // Predicated region
      $region9: #{tpu_custom_call.1} parent=5 // pred_check
        _
      $region10: #{tpu_custom_call.1} parent=5 // pred_check_branch
        %145 = sbr.rel (%p142) target = $region12
      $region11: #{tpu_custom_call.1} parent=5 // pred_region
        %s146 = ssub.s32 %s17, 1
        // Predicated region
        $region13: #{tpu_custom_call.1} parent=11 // pred_check
          %p147 = pneg %p64
        $region14: #{tpu_custom_call.1} parent=11 // pred_check_branch
          %149 = sbr.rel (%p147) target = $region16
        $region15: #{tpu_custom_call.1} parent=11 // pred_region
          _
        $region16: #{tpu_custom_call.1} parent=11 // pred_fallthru
          _
        // Predicated region
        $region17: #{tpu_custom_call.1} parent=11 // pred_check
          %p150 = pneg %p85
        $region18: #{tpu_custom_call.1} parent=11 // pred_check_branch
          %152 = sbr.rel (%p150) target = $region20
        $region19: #{tpu_custom_call.1} parent=11 // pred_region
          _
        $region20: #{tpu_custom_call.1} parent=11 // pred_fallthru
          _
        // Predicated region
        $region21: #{tpu_custom_call.1} parent=11 // pred_check
          %p153 = pneg %p106
        $region22: #{tpu_custom_call.1} parent=11 // pred_check_branch
          %155 = sbr.rel (%p153) target = $region24
        $region23: #{tpu_custom_call.1} parent=11 // pred_region
          %s157 = ssub.s32 256, 256
          %158 = vsyncadd [#allocation6], %s157
          %s159 = sshll.u32 [#allocation5], 4
          %s160 = int_to_ptr.vmem [resolvable:$true] %s159
          %165 = dma.hbm_to_vmem [thread:$0]  %s3, 256, %s160, [#allocation6], 64, 64, 4
        $region24: #{tpu_custom_call.1} parent=11 // pred_fallthru
          _
      $region12: #{tpu_custom_call.1} parent=5 // pred_fallthru
        _
      %p166 = scmp.lt.s32.totalorder %s17, 2
      // Predicated region
      $region25: #{tpu_custom_call.1} parent=5 // pred_check
        %p167 = pneg %p166
      $region26: #{tpu_custom_call.1} parent=5 // pred_check_branch
        %169 = sbr.rel (%p167) target = $region28
      $region27: #{tpu_custom_call.1} parent=5 // pred_region
        // Predicated region
        $region29: #{tpu_custom_call.1} parent=27 // pred_check
          %p170 = pneg %p37
        $region30: #{tpu_custom_call.1} parent=27 // pred_check_branch
          %172 = sbr.rel (%p170) target = $region32
        $region31: #{tpu_custom_call.1} parent=27 // pred_region
          %s173 = sand.u32 %s27, 1
          %s174 = scalar_lea.sflag [#allocation3], %s173
          %s175 = sand.u32 %s27, 1
          %s176 = smul.addr %s175, 8
          %s177 = scalar_lea.vmem [#allocation2], %s176
          %s179 = ssub.s32 128, 128
          %180 = vsyncadd %s174, %s179
          %s181 = smul.addr %s17, 128
          %s182 = scalar_lea.hbm %s0, %s181
          %s184 = sshll.u32 %s177, 4
          %s185 = int_to_ptr.vmem [resolvable:$true] %s184
          %187 = dma.hbm_to_vmem [thread:$0]  %s182, 128, %s185, %s174
        $region32: #{tpu_custom_call.1} parent=27 // pred_fallthru
          _
      $region28: #{tpu_custom_call.1} parent=5 // pred_fallthru
        _
      %p188 = scmp.le.s32.totalorder 1, %s17
      %p189 = scmp.lt.s32.totalorder %s17, 3
      %p190 = pnand %p188, %p189
      %p191 = pneg %p190
      // Predicated region
      $region33: #{tpu_custom_call.1} parent=5 // pred_check
        _
      $region34: #{tpu_custom_call.1} parent=5 // pred_check_branch
        %193 = sbr.rel (%p190) target = $region36
      $region35: #{tpu_custom_call.1} parent=5 // pred_region
        %s194 = ssub.s32 %s17, 1
        %s195 = sand.u32 %s30, 1
        %s196 = scalar_lea.sflag [#allocation3], %s195
        %s197 = sand.u32 %s30, 1
        %s198 = smul.addr %s197, 8
        %s199 = scalar_lea.vmem [#allocation2], %s198
        // Predicated region
        $region37: #{tpu_custom_call.1} parent=35 // pred_check
          %p200 = pneg %p43
        $region38: #{tpu_custom_call.1} parent=35 // pred_check_branch
          %202 = sbr.rel (%p200) target = $region40
        $region39: #{tpu_custom_call.1} parent=35 // pred_region
          %203 = dma.done %s196, 128
        $region40: #{tpu_custom_call.1} parent=35 // pred_fallthru
          _
        // Predicated region
        $region41: #{tpu_custom_call.1} parent=35 // pred_check
          %p204 = pneg %p106
        $region42: #{tpu_custom_call.1} parent=35 // pred_check_branch
          %206 = sbr.rel (%p204) target = $region44
        $region43: #{tpu_custom_call.1} parent=35 // pred_region
          %207 = dma.done [#allocation6], 256
        $region44: #{tpu_custom_call.1} parent=35 // pred_fallthru
          _
        %s208 = sand.u32 %s30, 1
        %s209 = scalar_lea.sflag [#allocation3], %s208
        %s210 = sand.u32 %s30, 1
        %s211 = smul.addr %s210, 8
        %s212 = scalar_lea.vmem [#allocation2], %s211
        %p213 = pneg %p43
        %p214 = pneg %p40
        %p215 = pneg %p64
        %p216 = pneg %p61
        %p217 = pneg %p85
        %p218 = pneg %p82
        %p219 = pneg %p106
        %p220 = pneg %p103
        %p221 = pneg %p132
        %p222 = pneg %p129
        %s223 = sand.u32 %s119, 1
        %s224 = scalar_lea.sflag [#allocation4], %s223
        %s225 = sand.u32 %s119, 1
        %s226 = smul.addr %s225, 8
        %s227 = scalar_lea.vmem [#allocation7], %s226
        %v229 = vld [vmem:[%s199] sm:$0xff]
        %v230 = vld [vmem:[%s1] sm:$0x1]
        %v231 = vld [vmem:[%s2] sm:$0x1]
        %vm232 = vcmask 261120
        %v233 = vsel %vm232, %v229, 0.0
        %234 = vadd.xlane.f32.xlu0 %v233
        %v235 = vpop.xlane.xlu0 %234
        %v236 = vrcp.pop 32.0
        %v237 = vmul.f32 %v235, %v236
        %v238 = vsub.f32 %v229, %v237
        %v239 = vmul.f32 %v238, %v238
        %v240 = vsel %vm232, %v239, 0.0
        %241 = vadd.xlane.f32.xlu0 %v240
        %v242 = vpop.xlane.xlu0 %241
        %v243 = vmul.f32 %v242, %v236
        %v244 = vadd.f32 %v243, 1e-05
        %v245 = vrsqrt.pop %v244
        %v246 = vmul.f32 %v238, %v245
        %v248 = vlaneseq
        %v249 = vshrl.u32 %v248, 7
        %v250 = vsub.s32 0, %v249
        %v251 = vrot.slane %v230, %v250
        %v253 = vmul.f32 %v246, %v251
        %v255 = vlaneseq
        %v256 = vshrl.u32 %v255, 7
        %v257 = vsub.s32 0, %v256
        %v258 = vrot.slane %v231, %v257
        %v260 = vadd.f32 %v253, %v258
        %v261 = vpack.c.bf16 %v260, %v260
        %v262 = vld [vmem:[#allocation5] sm:$0xf]
        %v263 = vld [vmem:[#allocation5 + $0x4] sm:$0xf]
        %v264 = vld [vmem:[#allocation5 + $0x8] sm:$0xf]
        %v265 = vld [vmem:[#allocation5 + $0xc] sm:$0xf]
        %v270 = vunpack.c.l.b16 %v262
        %v271 = vunpack.c.l.b16 %v263
        %v272 = vunpack.c.l.b16 %v264
        %v273 = vunpack.c.l.b16 %v265
        %v274 = vpack.c.b16 %v271, %v270
        %v275 = vpack.c.b16 %v273, %v272
        %v279 = vsel %vm232, %v261, 0
        %281 = vmatprep.subr.bf16.mxu0 0
        %282 = vmatpush1.bf16.msra.mxu0 %v274
        %283 = vmatprep.subr.bf16.mxu0 0
        %284 = vmatpush1.bf16.msra.mxu0 %v275
        %285 = vmatprep.subr.bf16.mxu0 0
        %286 = vmatpush1.bf16.msra.mxu0 0
        %287 = vmatprep.subr.bf16.mxu0 0
        %288 = vmatpush1.bf16.msra.mxu0 0
        %289 = vmatprep.subr.bf16.mxu0 0
        %290 = vmatpush1.bf16.msra.mxu0 0
        %291 = vmatprep.subr.bf16.mxu0 0
        %292 = vmatpush1.bf16.msra.mxu0 0
        %293 = vmatprep.subr.bf16.mxu0 0
        %294 = vmatpush1.bf16.msra.mxu0 0
        %295 = vmatprep.subr.bf16.mxu0 0
        %296 = vmatpush1.bf16.msra.mxu0 0
        %297 = vmatprep.subr.bf16.mxu0 0
        %298 = vmatpush1.bf16.msra.mxu0 0
        %299 = vmatprep.subr.bf16.mxu0 0
        %300 = vmatpush1.bf16.msra.mxu0 0
        %301 = vmatprep.subr.bf16.mxu0 0
        %302 = vmatpush1.bf16.msra.mxu0 0
        %303 = vmatprep.subr.bf16.mxu0 0
        %304 = vmatpush1.bf16.msra.mxu0 0
        %305 = vmatprep.subr.bf16.mxu0 0
        %306 = vmatpush1.bf16.msra.mxu0 0
        %307 = vmatprep.subr.bf16.mxu0 0
        %308 = vmatpush1.bf16.msra.mxu0 0
        %309 = vmatprep.subr.bf16.mxu0 0
        %310 = vmatpush1.bf16.msra.mxu0 0
        %311 = vmatprep.subr.bf16.mxu0 0
        %312 = vmatpush1.bf16.msra.mxu0 0
        %313 = vmatprep.mubr.bf16.mxu0 0
        %314 = vmatmul.mubr.bf16.gmra.mrb[0].mxu0 %v279
        %v315 = vpop.f32.mrb[0].mxu0
        %v316 = vadd.f32 0.0, %v315
        %v317 = vpop.f32.mrb[0].mxu0
        %v318 = vpop.f32.mrb[0].mxu0
        %v319 = vpop.f32.mrb[0].mxu0
        %320 = vdwg.mxu0
        %vm321 = vcmask 785408
        %322 = vst.msk [vmem:[%s227] sm:$0xff] %vm321, %v316
        %s323 = sand.u32 %s119, 1
        %s324 = scalar_lea.sflag [#allocation4], %s323
        %s325 = sand.u32 %s119, 1
        %s326 = smul.addr %s325, 8
        %s327 = scalar_lea.vmem [#allocation7], %s326
        // Predicated region
        $region45: #{tpu_custom_call.1} parent=35 // pred_check
          %p328 = pneg %p129
        $region46: #{tpu_custom_call.1} parent=35 // pred_check_branch
          %330 = sbr.rel (%p328) target = $region48
        $region47: #{tpu_custom_call.1} parent=35 // pred_region
          %s332 = ssub.s32 128, 128
          %333 = vsyncadd %s324, %s332
          %s334 = smul.addr %s22, 128
          %s335 = scalar_lea.hbm %s4, %s334
          %s337 = sshll.u32 %s327, 4
          %s338 = int_to_ptr.vmem [resolvable:$true] %s337
          %340 = dma.vmem_to_hbm [thread:$0]  %s338, 128, %s335, %s324
        $region48: #{tpu_custom_call.1} parent=35 // pred_fallthru
          _
      $region36: #{tpu_custom_call.1} parent=5 // pred_fallthru
        _
      %p341 = scmp.le.s32.totalorder 2, %s17
      // Predicated region
      $region49: #{tpu_custom_call.1} parent=5 // pred_check
        %p342 = pneg %p341
      $region50: #{tpu_custom_call.1} parent=5 // pred_check_branch
        %344 = sbr.rel (%p342) target = $region52
      $region51: #{tpu_custom_call.1} parent=5 // pred_region
        %s345 = ssub.s32 %s17, 2
        // Predicated region
        $region53: #{tpu_custom_call.1} parent=51 // pred_check
          %p346 = pneg %p135
        $region54: #{tpu_custom_call.1} parent=51 // pred_check_branch
          %348 = sbr.rel (%p346) target = $region56
        $region55: #{tpu_custom_call.1} parent=51 // pred_region
          %s349 = sand.u32 %s120, 1
          %s350 = scalar_lea.sflag [#allocation4], %s349
          %s351 = sand.u32 %s120, 1
          %s352 = smul.addr %s351, 8
          %s353 = scalar_lea.vmem [#allocation7], %s352
          %354 = dma.done %s350, 128
        $region56: #{tpu_custom_call.1} parent=51 // pred_fallthru
          _
      $region52: #{tpu_custom_call.1} parent=5 // pred_fallthru
        _
    $region6: #{tpu_custom_call.1} parent=1 // loop_footer
      %s21 = sadd.s32 1, %s17
    $region7: #{tpu_custom_call.1} parent=1 // loop_footer_branch
      %16 = sbr.rel target = $region3
    $region8: #{tpu_custom_call.1} parent=1 // loop_exit
      _
    %355 = vsyncpa [#allocation3], 1
    %s356 = scalar_lea.sflag [#allocation3], 1
    %357 = vsyncpa %s356, 1
    %358 = vsyncpa [#allocation6], 1
    %359 = vsyncpa [#allocation4], 1
    %s360 = scalar_lea.sflag [#allocation4], 1
    %361 = vsyncpa %s360, 1

</llo_original>
